<compile_context>
chip_gen: v6e
topology: v6e:2x2x1
jax: 0.10.0
libtpu: 0.0.40
codegen_flags: <defaults>
</compile_context>

<pallas_src>
import jax
import jax.numpy as jnp
from jax.experimental import pallas as pl
from jax.experimental.pallas import tpu as pltpu

_LANE = 128
_SUBLANE = 8
_SMALL_LIMIT_BYTES = 512 * 1024          # single-block (no grid) path below this
_TARGET_BLOCK_BYTES = 4 * 1024 * 1024    # ~4 MiB per grid step in the large path
_MIN_GRID_STEPS = 4                      # >= 2 steps per TensorCore on v7x


def _swish_kernel(x_ref, o_ref):
    # swish(x) = x * sigmoid(x);  sigmoid(x) = 0.5 * (tanh(0.5*x) + 1)
    # -> exactly one EUP transcendental per vreg; the rest is cheap VALU work
    #    (kernel is HBM-bound, VALU has plenty of slack).  f32 compute upcast
    #    keeps bf16 I/O safe on v5e (no bf16 VPU/EUP there).
    x = x_ref[...].astype(jnp.float32)
    sig = 0.5 * (jnp.tanh(0.5 * x) + 1.0)
    o_ref[...] = (x * sig).astype(o_ref.dtype)


def _pick_width(n: int):
    """Largest lane-dense width that divides n exactly (no wrapper-side pad)."""
    for w in (1024, 512, 256, 128):
        if n % w == 0:
            return w
    return None


@jax.jit
def swish(x: jax.Array) -> jax.Array:
    """Elementwise swish for any shape; lane-dense 2-D layout inside."""
    orig_shape = x.shape
    dtype = x.dtype
    n = x.size
    itemsize = jnp.dtype(dtype).itemsize

    x_flat = x.reshape(-1)

    if n * itemsize <= _SMALL_LIMIT_BYTES:
        # ---- small path: one block, no grid, whole array resident in VMEM ----
        chunk = _LANE * _SUBLANE  # 1024 elements
        n_pad = pl.cdiv(n, chunk) * chunk
        if n_pad != n:
            x_flat = jnp.pad(x_flat, (0, n_pad - n))
        rows, width = _SUBLANE, n_pad // _SUBLANE     # lane-wide, e.g. (8, 256)
        x2d = x_flat.reshape(rows, width)

        out2d = pl.pallas_call(
            _swish_kernel,
            out_shape=jax.ShapeDtypeStruct((rows, width), dtype),
            in_specs=[pl.BlockSpec(memory_space=pltpu.MemorySpace.VMEM)],
            out_specs=pl.BlockSpec(memory_space=pltpu.MemorySpace.VMEM),
        )(x2d)

        out_flat = out2d.reshape(-1)
        if n_pad != n:
            out_flat = out_flat[:n]
        return out_flat.reshape(orig_shape)

    # ---- large path: lane-dense slab, ~4 MiB blocks, 1-D parallel grid ----
    width = _pick_width(n)
    padded = width is None
    if padded:
        # TODO(synk): rare fallback (n not a multiple of 128) costs one extra
        # HBM pass for pad + slice; all common tensor sizes avoid it.
        width = 1024
        n_pad = pl.cdiv(n, width) * width
        x_flat = jnp.pad(x_flat, (0, n_pad - n))
    else:
        n_pad = n
    rows = n_pad // width
    x2d = x_flat.reshape(rows, width)                 # contiguous reshape: free

    # ~4 MiB row-blocks; halve until the grid has >= _MIN_GRID_STEPS steps so
    # both v7x TensorCores get at least 2 pipelined steps each.
    tr = max(_SUBLANE,
             (_TARGET_BLOCK_BYTES // (width * itemsize)) // _SUBLANE * _SUBLANE)
    while pl.cdiv(rows, tr) < _MIN_GRID_STEPS and tr > _SUBLANE:
        tr = max(_SUBLANE, (tr // 2) // _SUBLANE * _SUBLANE)

    out2d = pl.pallas_call(
        _swish_kernel,
        out_shape=jax.ShapeDtypeStruct((rows, width), dtype),
        grid=(pl.cdiv(rows, tr),),                    # partial last block masked
        in_specs=[pl.BlockSpec((tr, width), lambda i: (i, 0))],
        out_specs=pl.BlockSpec((tr, width), lambda i: (i, 0)),
        compiler_params=pltpu.CompilerParams(
            dimension_semantics=("parallel",),
            vmem_limit_bytes=32 * 1024 * 1024,        # 2x(in+out) 4 MiB buffers
        ),
    )(x2d)

    out_flat = out2d.reshape(-1)
    if padded:
        out_flat = out_flat[:n]
    return out_flat.reshape(orig_shape)


if __name__ == "__main__":
    key = jax.random.PRNGKey(0)

    # NCHW input consistent with the module's conv-style usage.
    x = jax.random.normal(key, (2, 4, 16, 16), dtype=jnp.float32)
    y = swish(x)
    jax.block_until_ready(y)

    y_ref = x * jax.nn.sigmoid(x)
    assert y.shape == x.shape and y.dtype == x.dtype
    assert jnp.allclose(y, y_ref, atol=1e-4, rtol=1e-4)

    # Also exercise the gridded/pipelined path, including a partial last
    # row-block (600 rows is not a multiple of tr), to check masked boundaries.
    x_big = jax.random.normal(jax.random.PRNGKey(1), (600, 1024), dtype=jnp.float32)
    y_big = swish(x_big)
    jax.block_until_ready(y_big)
    y_big_ref = x_big * jax.nn.sigmoid(x_big)
    assert y_big.shape == x_big.shape and y_big.dtype == x_big.dtype
    assert jnp.allclose(y_big, y_big_ref, atol=1e-4, rtol=1e-4)

    print("KERNEL_OK")
</pallas_src>

<mosaic_0001>
module attributes {stable_mosaic.version = 11 : i64} {
  func.func @_swish_kernel(%arg0: memref<8x256xf32, #tpu.memory_space<vmem>>, %arg1: memref<8x256xf32, #tpu.memory_space<vmem>>) attributes {dimension_semantics = [], scalar_prefetch = 0 : i64, scratch_operands = 0 : i64, tpu.core_type = #tpu.core_type<tc>} {
    %c0 = arith.constant 0 : index
    %c0_0 = arith.constant 0 : index
    %0 = vector.load %arg0[%c0, %c0_0] : memref<8x256xf32, #tpu.memory_space<vmem>>, vector<8x256xf32>
    %cst = arith.constant 5.000000e-01 : f32
    %1 = vector.broadcast %cst : f32 to vector<8x256xf32>
    %2 = arith.mulf %1, %0 : vector<8x256xf32>
    %3 = math.tanh %2 : vector<8x256xf32>
    %cst_1 = arith.constant 1.000000e+00 : f32
    %4 = vector.broadcast %cst_1 : f32 to vector<8x256xf32>
    %5 = arith.addf %3, %4 : vector<8x256xf32>
    %cst_2 = arith.constant 5.000000e-01 : f32
    %6 = vector.broadcast %cst_2 : f32 to vector<8x256xf32>
    %7 = arith.mulf %6, %5 : vector<8x256xf32>
    %8 = arith.mulf %0, %7 : vector<8x256xf32>
    %c0_3 = arith.constant 0 : index
    %c0_4 = arith.constant 0 : index
    %9 = vector.load %arg1[%c0_3, %c0_4] : memref<8x256xf32, #tpu.memory_space<vmem>>, vector<8x256xf32>
    tpu.vector_store %arg1[%c0_3, %c0_4], %8 {strides = array<i32>} : memref<8x256xf32, #tpu.memory_space<vmem>>, vector<8x256xf32>,
    return
  }
}

</mosaic_0001>

<llo_original>
// kernel: swish.1
$region0: #{swish.1}
  #allocation0 [shape = 'u32[]', space=smem, size = 0x4, offset = 0x4, fixed_abs, tag = 'smem constant byte address 0x4 - core index']
  #allocation1 [shape = 'u32[144,128]{1,0:T(1,128)}', space=vmem, size = 0x12000, scoped, tag = 'internal scratch']
  %s0 = inlined_call_operand.vmem [shape: f32[8,256], index: 0, kind: input, shape index: {}]
  %s1 = inlined_call_operand.vmem [shape: f32[8,256], index: 1, kind: output, shape index: {}]
  %s2 = sld [smem:[#allocation0]]
  $region14: #{swish.1} parent=0
    _
  %s4 = ssub.s32 1, %s2
  %s5 = scalar_select 0, %s4, %s2
  // Predicated region
  $region2: #{swish.1} parent=0 // pred_check
    _
  $region3: #{swish.1} parent=0 // pred_check_branch
    %7 = sbr.rel (0) target = $region5
  $region4: #{swish.1} parent=0 // pred_region
    _
  $region5: #{swish.1} parent=0 // pred_fallthru
    _
  %v8 = vld [vmem:[%s0] sm:$0xff]
  %v9 = vld [vmem:[%s0 + $0x8] sm:$0xff]
  %v10 = vmul.f32 %v8, 0.5
  %v11 = vmul.f32 %v9, 0.5
  %v12 = vtanh.pop %v10
  %v13 = vtanh.pop %v11
  %v14 = vadd.f32 %v12, 1.0
  %v15 = vadd.f32 %v13, 1.0
  %v16 = vmul.f32 %v14, 0.5
  %v17 = vmul.f32 %v15, 0.5
  %v18 = vmul.f32 %v8, %v16
  %v19 = vmul.f32 %v9, %v17
  %20 = vst [vmem:[%s1] sm:$0xff] %v18
  %21 = vst [vmem:[%s1 + $0x8] sm:$0xff] %v19
  // Predicated region
  $region6: #{swish.1} parent=0 // pred_check
    _
  $region7: #{swish.1} parent=0 // pred_check_branch
    %23 = sbr.rel (0) target = $region9
  $region8: #{swish.1} parent=0 // pred_region
    _
  $region9: #{swish.1} parent=0 // pred_fallthru
    _
  // Predicated region
  $region10: #{swish.1} parent=0 // pred_check
    _
  $region11: #{swish.1} parent=0 // pred_check_branch
    %25 = sbr.rel (0) target = $region13
  $region12: #{swish.1} parent=0 // pred_region
    _
  $region13: #{swish.1} parent=0 // pred_fallthru
    _

</llo_original>
